<compile_context>
chip_gen: v6e
topology: v6e:2x2x1
jax: 0.10.0
libtpu: 0.0.40
codegen_flags: <defaults>
</compile_context>

<pallas_src>
import jax
import jax.numpy as jnp
from jax.experimental import pallas as pl
from jax.experimental.pallas import tpu as pltpu

_MiB = 1024 * 1024
_SINGLE_BLOCK_LIMIT = 8 * _MiB    # path-1 threshold: whole problem resident, gridless
_TILE_BUDGET = 32 * _MiB          # live (double-buffered) tile bytes for the tiled paths
_VMEM_LIMIT = 48 * _MiB           # explicit scoped-VMEM limit; < v7x 64 MiB physical


def _hadamard_kernel(x_ref, w_ref, b_ref, o_ref):
    # Elementwise multiply-add on the VPU; weights/bias broadcast over the batch (size-1) dim.
    o_ref[...] = x_ref[...] * w_ref[...] + b_ref[...]


def hadamard_product(x, weights, bias):
    """x: (B, *shape); weights/bias: (*shape). Returns x * weights + bias."""
    orig_shape = x.shape
    B = x.shape[0]
    F = 1
    for d in x.shape[1:]:
        F *= d

    dtype = x.dtype
    itemsize = jnp.dtype(dtype).itemsize

    x2 = x.reshape(B, F)
    w2 = weights.reshape(1, F)
    b2 = bias.reshape(1, F)

    # ---- Path 1: single gridless block (whole problem resident in VMEM) ----------------------
    if (2 * B * F + 2 * F) * itemsize <= _SINGLE_BLOCK_LIMIT:
        out2 = pl.pallas_call(
            _hadamard_kernel,
            out_shape=jax.ShapeDtypeStruct((B, F), dtype),
            compiler_params=pltpu.CompilerParams(vmem_limit_bytes=32 * _MiB),
        )(x2, w2, b2)
        return out2.reshape(orig_shape)

    # ---- Path 2: small batch (B < 8), 128-aligned F -> 3-D (B, Fo, Fi) tiling -----------------
    # A (B<8, TF) tile only uses B of 8 sublanes and forces masked partial stores; folding F into
    # the sublane axis gives full-sublane unmasked tiles and larger contiguous DMAs.
    if B < 8 and F % 128 == 0:
        Fi = 512 if F % 512 == 0 else (256 if F % 256 == 0 else 128)
        Fo = F // Fi
        # live VMEM ~ 2x(x + out + w + b) tiles = 8 * TFo * Fi * itemsize
        tfo = max(8, (_TILE_BUDGET // (8 * Fi * itemsize)) // 8 * 8)
        TFo = Fo if tfo >= Fo else tfo
        if B == 1 and pl.cdiv(Fo, TFo) == 1 and TFo % 16 == 0:
            TFo //= 2          # keep >= 2 grid steps so both v7x TensorCores get work
        grid = (pl.cdiv(Fo, TFo), B)   # batch innermost -> weights/bias tiles stay resident
        out3 = pl.pallas_call(
            _hadamard_kernel,
            out_shape=jax.ShapeDtypeStruct((B, Fo, Fi), dtype),
            grid=grid,
            in_specs=[
                pl.BlockSpec((1, TFo, Fi), lambda fo, b: (b, fo, 0)),   # x tile
                pl.BlockSpec((1, TFo, Fi), lambda fo, b: (0, fo, 0)),   # weights (resident)
                pl.BlockSpec((1, TFo, Fi), lambda fo, b: (0, fo, 0)),   # bias    (resident)
            ],
            out_specs=pl.BlockSpec((1, TFo, Fi), lambda fo, b: (b, fo, 0)),
            compiler_params=pltpu.CompilerParams(
                dimension_semantics=("parallel", "parallel"),
                vmem_limit_bytes=_VMEM_LIMIT,
            ),
        )(x2.reshape(B, Fo, Fi), w2.reshape(1, Fo, Fi), b2.reshape(1, Fo, Fi))
        return out3.reshape(orig_shape)

    # ---- Path 3: general tiled (TB, TF) blocks ------------------------------------------------
    # Lane tile: always a multiple of 128 when F >= 128; the cdiv grid + masked edge block handles
    # a ragged F.  Only fall back to TF = F when F < 128 (full-extent block is legal).
    f_lane_cap = F if F < 128 else 128 * (F // 128)   # largest lane-aligned tile <= F
    TF = min(4096, f_lane_cap)

    # Sublane tile: power-of-two >= 8 sized against the live-tile budget
    # (x + out double-buffered at TB*TF, w + b double-buffered at 1*TF).
    TB = 512
    while TB > 8 and (4 * TB * TF + 4 * TF) * itemsize > _TILE_BUDGET:
        TB //= 2
    TB = min(TB, B)   # multiple of 8, or the full batch extent -> legal block shape

    # Re-grow TF to fill the budget now that TB is final (critical for small-batch / large-F,
    # which previously collapsed to ~32 KiB tiles and became grid-step-overhead bound).
    if F >= 128:
        tf_cap = _TILE_BUDGET // ((4 * TB + 4) * itemsize)
        tf_cap = max(128, (tf_cap // 128) * 128)
        TF = min(max(TF, tf_cap), f_lane_cap)

    # Avoid a degenerate 1-step grid (would leave one v7x TensorCore idle).
    if pl.cdiv(B, TB) * pl.cdiv(F, TF) == 1:
        if TF >= 256:
            TF = max(128, ((TF // 2) // 128) * 128)
        elif TB % 16 == 0:
            TB //= 2

    # Batch-tile axis iterates fastest (innermost) so the weights/bias block index is constant
    # across it and those tiles stay resident.  Both axes independent -> "parallel".
    grid = (pl.cdiv(F, TF), pl.cdiv(B, TB))
    out2 = pl.pallas_call(
        _hadamard_kernel,
        out_shape=jax.ShapeDtypeStruct((B, F), dtype),
        grid=grid,
        in_specs=[
            pl.BlockSpec((TB, TF), lambda f, b: (b, f)),   # x tile
            pl.BlockSpec((1, TF), lambda f, b: (0, f)),    # weights (resident across batch tiles)
            pl.BlockSpec((1, TF), lambda f, b: (0, f)),    # bias    (resident across batch tiles)
        ],
        out_specs=pl.BlockSpec((TB, TF), lambda f, b: (b, f)),
        compiler_params=pltpu.CompilerParams(
            dimension_semantics=("parallel", "parallel"),
            vmem_limit_bytes=_VMEM_LIMIT,
        ),
    )(x2, w2, b2)
    return out2.reshape(orig_shape)


def _check(key, batch, shape, dtype=jnp.float32):
    kx, kw, kb = jax.random.split(key, 3)
    x = jax.random.normal(kx, (batch,) + shape, dtype=dtype)
    w = jax.random.normal(kw, shape, dtype=dtype)
    b = jax.random.normal(kb, shape, dtype=dtype)
    out = jax.block_until_ready(hadamard_product(x, w, b))
    ref = x * w + b
    assert out.shape == x.shape
    assert jnp.allclose(out, ref, atol=1e-5, rtol=1e-5), f"mismatch for shape {(batch,) + shape}"


if __name__ == "__main__":
    key = jax.random.PRNGKey(0)
    k0, k1, k2, k3 = jax.random.split(key, 4)

    # Primary small test (matches the module's intended use): batch=2, layer shape (4, 16, 16).
    _check(k0, 2, (4, 16, 16))            # path 1: gridless resident block

    # Additional coverage of the tiled paths (still quick):
    _check(k1, 2, (8, 256, 512))          # path 2: small batch, 3-D (B, Fo, Fi) tiling
    _check(k2, 16, (64, 1024))            # path 3: general 2-D tiling, TF re-grow + grid split
    _check(k3, 16, (130000,))             # path 3: ragged F (not a multiple of 128)

    print("KERNEL_OK")
</pallas_src>

<mosaic_0001>
module attributes {stable_mosaic.version = 11 : i64} {
  func.func @_hadamard_kernel(%arg0: memref<2x1024xf32, #tpu.memory_space<vmem>>, %arg1: memref<1x1024xf32, #tpu.memory_space<vmem>>, %arg2: memref<1x1024xf32, #tpu.memory_space<vmem>>, %arg3: memref<2x1024xf32, #tpu.memory_space<vmem>>) attributes {dimension_semantics = [], scalar_prefetch = 0 : i64, scratch_operands = 0 : i64, tpu.core_type = #tpu.core_type<tc>} {
    %c0 = arith.constant 0 : index
    %c0_0 = arith.constant 0 : index
    %0 = vector.load %arg0[%c0, %c0_0] : memref<2x1024xf32, #tpu.memory_space<vmem>>, vector<2x1024xf32>
    %c0_1 = arith.constant 0 : index
    %c0_2 = arith.constant 0 : index
    %1 = vector.load %arg1[%c0_1, %c0_2] : memref<1x1024xf32, #tpu.memory_space<vmem>>, vector<1x1024xf32>
    %2 = vector.broadcast %1 : vector<1x1024xf32> to vector<2x1024xf32>
    %3 = arith.mulf %0, %2 : vector<2x1024xf32>
    %c0_3 = arith.constant 0 : index
    %c0_4 = arith.constant 0 : index
    %4 = vector.load %arg2[%c0_3, %c0_4] : memref<1x1024xf32, #tpu.memory_space<vmem>>, vector<1x1024xf32>
    %5 = vector.broadcast %4 : vector<1x1024xf32> to vector<2x1024xf32>
    %6 = arith.addf %3, %5 : vector<2x1024xf32>
    %c0_5 = arith.constant 0 : index
    %c0_6 = arith.constant 0 : index
    %7 = vector.load %arg3[%c0_5, %c0_6] : memref<2x1024xf32, #tpu.memory_space<vmem>>, vector<2x1024xf32>
    tpu.vector_store %arg3[%c0_5, %c0_6], %6 {strides = array<i32>} : memref<2x1024xf32, #tpu.memory_space<vmem>>, vector<2x1024xf32>,
    return
  }
}

</mosaic_0001>

<llo_original>
// kernel: tpu_custom_call.1
$region0: #{tpu_custom_call.1}
  #allocation0 [shape = 'u32[]', space=smem, size = 0x4, offset = 0x4, fixed_abs, tag = 'smem constant byte address 0x4 - core index']
  #allocation1 [shape = 'u32[144,128]{1,0:T(1,128)}', space=vmem, size = 0x12000, scoped, tag = 'internal scratch']
  %s0 = inlined_call_operand.hbm [shape: f32[2,1024], index: 0, kind: input, shape index: {}]
  %s1 = inlined_call_operand.hbm [shape: f32[1,1024], index: 1, kind: input, shape index: {}]
  %s2 = inlined_call_operand.hbm [shape: f32[1,1024], index: 2, kind: input, shape index: {}]
  %s3 = inlined_call_operand.hbm [shape: f32[2,1024], index: 3, kind: output, shape index: {}]
  %s4 = sld [smem:[#allocation0]]
  $region34: #{tpu_custom_call.1} parent=0
    _
  %s6 = ssub.s32 1, %s4
  %s7 = scalar_select 0, %s6, %s4
  $region1: #{tpu_custom_call.1} parent=0
    #allocation2 [shape = 'u8[8192]{0}', space=vmem, size = 0x2000, scoped, tag = 'input window, operand 0, single buffered']
    #allocation3 [shape = 's32[1]{0}', space=sflag, size = 0x4, scoped, tag = 'scoped memory for tpu_custom_call.1']
    #allocation4 [shape = 's32[1]{0}', space=sflag, size = 0x4, scoped, tag = 'scoped memory for tpu_custom_call.1']
    #allocation5 [shape = 'u8[4096]{0}', space=vmem, size = 0x1000, scoped, tag = 'input window, operand 1, single buffered']
    #allocation6 [shape = 's32[1]{0}', space=sflag, size = 0x4, scoped, tag = 'scoped memory for tpu_custom_call.1']
    #allocation7 [shape = 'u8[4096]{0}', space=vmem, size = 0x1000, scoped, tag = 'input window, operand 2, single buffered']
    #allocation8 [shape = 'u8[8192]{0}', space=vmem, size = 0x2000, scoped, tag = 'output window, operand 0, single buffered']
    %8 = vsyncpa [#allocation3], 0
    %9 = vsyncpa [#allocation6], 0
    %10 = vsyncpa [#allocation4], 0
    // Predicated region
    $region2: #{tpu_custom_call.1} parent=1 // pred_check
      _
    $region3: #{tpu_custom_call.1} parent=1 // pred_check_branch
      %12 = sbr.rel (0) target = $region5
    $region4: #{tpu_custom_call.1} parent=1 // pred_region
      %s14 = ssub.s32 256, 256
      %15 = vsyncadd [#allocation3], %s14
      %s17 = sshll.u32 [#allocation2], 4
      %s18 = int_to_ptr.vmem [resolvable:$true] %s17
      %20 = dma.hbm_to_vmem [thread:$0]  %s0, 256, %s18, [#allocation3]
    $region5: #{tpu_custom_call.1} parent=1 // pred_fallthru
      _
    // Predicated region
    $region6: #{tpu_custom_call.1} parent=1 // pred_check
      _
    $region7: #{tpu_custom_call.1} parent=1 // pred_check_branch
      %22 = sbr.rel (0) target = $region9
    $region8: #{tpu_custom_call.1} parent=1 // pred_region
      %s24 = ssub.s32 128, 128
      %25 = vsyncadd [#allocation6], %s24
      %s27 = sshll.u32 [#allocation5], 4
      %s28 = int_to_ptr.vmem [resolvable:$true] %s27
      %30 = dma.hbm_to_vmem [thread:$0]  %s1, 128, %s28, [#allocation6]
    $region9: #{tpu_custom_call.1} parent=1 // pred_fallthru
      _
    // Predicated region
    $region10: #{tpu_custom_call.1} parent=1 // pred_check
      _
    $region11: #{tpu_custom_call.1} parent=1 // pred_check_branch
      %32 = sbr.rel (0) target = $region13
    $region12: #{tpu_custom_call.1} parent=1 // pred_region
      %s34 = ssub.s32 128, 128
      %35 = vsyncadd [#allocation6], %s34
      %s37 = sshll.u32 [#allocation7], 4
      %s38 = int_to_ptr.vmem [resolvable:$true] %s37
      %40 = dma.hbm_to_vmem [thread:$0]  %s2, 128, %s38, [#allocation6]
    $region13: #{tpu_custom_call.1} parent=1 // pred_fallthru
      _
    // Predicated region
    $region14: #{tpu_custom_call.1} parent=1 // pred_check
      _
    $region15: #{tpu_custom_call.1} parent=1 // pred_check_branch
      %42 = sbr.rel (0) target = $region17
    $region16: #{tpu_custom_call.1} parent=1 // pred_region
      %43 = dma.done [#allocation3], 256
    $region17: #{tpu_custom_call.1} parent=1 // pred_fallthru
      _
    // Predicated region
    $region18: #{tpu_custom_call.1} parent=1 // pred_check
      _
    $region19: #{tpu_custom_call.1} parent=1 // pred_check_branch
      %45 = sbr.rel (0) target = $region21
    $region20: #{tpu_custom_call.1} parent=1 // pred_region
      %46 = dma.done [#allocation6], 128
    $region21: #{tpu_custom_call.1} parent=1 // pred_fallthru
      _
    // Predicated region
    $region22: #{tpu_custom_call.1} parent=1 // pred_check
      _
    $region23: #{tpu_custom_call.1} parent=1 // pred_check_branch
      %48 = sbr.rel (0) target = $region25
    $region24: #{tpu_custom_call.1} parent=1 // pred_region
      %49 = dma.done [#allocation6], 128
    $region25: #{tpu_custom_call.1} parent=1 // pred_fallthru
      _
    %v50 = vld [vmem:[#allocation2] sm:$0xff]
    %v51 = vld [vmem:[#allocation2 + $0x8] sm:$0xff]
    %v52 = vld [vmem:[#allocation5] sm:$0xff]
    %v54 = vlaneseq
    %v55 = vshrl.u32 %v54, 7
    %v56 = vsub.s32 0, %v55
    %v57 = vrot.slane %v52, %v56
    %v58 = vlaneseq
    %v59 = vshrl.u32 %v58, 7
    %v60 = vsub.s32 1, %v59
    %v61 = vrot.slane %v52, %v60
    %v62 = vlaneseq
    %v63 = vshrl.u32 %v62, 7
    %v64 = vsub.s32 2, %v63
    %v65 = vrot.slane %v52, %v64
    %v66 = vlaneseq
    %v67 = vshrl.u32 %v66, 7
    %v68 = vsub.s32 3, %v67
    %v69 = vrot.slane %v52, %v68
    %v70 = vlaneseq
    %v71 = vshrl.u32 %v70, 7
    %v72 = vsub.s32 4, %v71
    %v73 = vrot.slane %v52, %v72
    %v74 = vlaneseq
    %v75 = vshrl.u32 %v74, 7
    %v76 = vsub.s32 5, %v75
    %v77 = vrot.slane %v52, %v76
    %v78 = vlaneseq
    %v79 = vshrl.u32 %v78, 7
    %v80 = vsub.s32 6, %v79
    %v81 = vrot.slane %v52, %v80
    %v82 = vlaneseq
    %v83 = vshrl.u32 %v82, 7
    %v84 = vsub.s32 7, %v83
    %v85 = vrot.slane %v52, %v84
    %v86 = vcombine.low %v57, %v61
    %v87 = vcombine.low %v65, %v69
    %v89 = vunpack.c.l.s4 1983009808
    %v90 = vunpack.c.0.s8 %v89
    %v91 = vlaneseq
    %v92 = vshrl.u32 %v91, 7
    %v93 = vsub.s32 %v90, %v92
    %v94 = vrot.slane %v86, %v93
    %v96 = vunpack.c.l.s4 1983009808
    %v97 = vunpack.c.0.s8 %v96
    %v98 = vlaneseq
    %v99 = vshrl.u32 %v98, 7
    %v100 = vsub.s32 %v97, %v99
    %v101 = vrot.slane %v87, %v100
    %v102 = vcombine.low %v94, %v101
    %v103 = vcombine.low %v73, %v77
    %v104 = vcombine.low %v81, %v85
    %v106 = vunpack.c.l.s4 1983009808
    %v107 = vunpack.c.0.s8 %v106
    %v108 = vlaneseq
    %v109 = vshrl.u32 %v108, 7
    %v110 = vsub.s32 %v107, %v109
    %v111 = vrot.slane %v103, %v110
    %v113 = vunpack.c.l.s4 1983009808
    %v114 = vunpack.c.0.s8 %v113
    %v115 = vlaneseq
    %v116 = vshrl.u32 %v115, 7
    %v117 = vsub.s32 %v114, %v116
    %v118 = vrot.slane %v104, %v117
    %v119 = vcombine.low %v111, %v118
    %v122 = vmul.f32 %v50, %v102
    %v123 = vmul.f32 %v51, %v119
    %v124 = vld [vmem:[#allocation7] sm:$0xff]
    %v126 = vlaneseq
    %v127 = vshrl.u32 %v126, 7
    %v128 = vsub.s32 0, %v127
    %v129 = vrot.slane %v124, %v128
    %v130 = vlaneseq
    %v131 = vshrl.u32 %v130, 7
    %v132 = vsub.s32 1, %v131
    %v133 = vrot.slane %v124, %v132
    %v134 = vlaneseq
    %v135 = vshrl.u32 %v134, 7
    %v136 = vsub.s32 2, %v135
    %v137 = vrot.slane %v124, %v136
    %v138 = vlaneseq
    %v139 = vshrl.u32 %v138, 7
    %v140 = vsub.s32 3, %v139
    %v141 = vrot.slane %v124, %v140
    %v142 = vlaneseq
    %v143 = vshrl.u32 %v142, 7
    %v144 = vsub.s32 4, %v143
    %v145 = vrot.slane %v124, %v144
    %v146 = vlaneseq
    %v147 = vshrl.u32 %v146, 7
    %v148 = vsub.s32 5, %v147
    %v149 = vrot.slane %v124, %v148
    %v150 = vlaneseq
    %v151 = vshrl.u32 %v150, 7
    %v152 = vsub.s32 6, %v151
    %v153 = vrot.slane %v124, %v152
    %v154 = vlaneseq
    %v155 = vshrl.u32 %v154, 7
    %v156 = vsub.s32 7, %v155
    %v157 = vrot.slane %v124, %v156
    %v158 = vcombine.low %v129, %v133
    %v159 = vcombine.low %v137, %v141
    %v161 = vunpack.c.l.s4 1983009808
    %v162 = vunpack.c.0.s8 %v161
    %v163 = vlaneseq
    %v164 = vshrl.u32 %v163, 7
    %v165 = vsub.s32 %v162, %v164
    %v166 = vrot.slane %v158, %v165
    %v168 = vunpack.c.l.s4 1983009808
    %v169 = vunpack.c.0.s8 %v168
    %v170 = vlaneseq
    %v171 = vshrl.u32 %v170, 7
    %v172 = vsub.s32 %v169, %v171
    %v173 = vrot.slane %v159, %v172
    %v174 = vcombine.low %v166, %v173
    %v175 = vcombine.low %v145, %v149
    %v176 = vcombine.low %v153, %v157
    %v178 = vunpack.c.l.s4 1983009808
    %v179 = vunpack.c.0.s8 %v178
    %v180 = vlaneseq
    %v181 = vshrl.u32 %v180, 7
    %v182 = vsub.s32 %v179, %v181
    %v183 = vrot.slane %v175, %v182
    %v185 = vunpack.c.l.s4 1983009808
    %v186 = vunpack.c.0.s8 %v185
    %v187 = vlaneseq
    %v188 = vshrl.u32 %v187, 7
    %v189 = vsub.s32 %v186, %v188
    %v190 = vrot.slane %v176, %v189
    %v191 = vcombine.low %v183, %v190
    %v194 = vadd.f32 %v122, %v174
    %v195 = vadd.f32 %v123, %v191
    %196 = vst [vmem:[#allocation8] sm:$0xff] %v194
    %197 = vst [vmem:[#allocation8 + $0x8] sm:$0xff] %v195
    // Predicated region
    $region26: #{tpu_custom_call.1} parent=1 // pred_check
      _
    $region27: #{tpu_custom_call.1} parent=1 // pred_check_branch
      %199 = sbr.rel (0) target = $region29
    $region28: #{tpu_custom_call.1} parent=1 // pred_region
      %s201 = ssub.s32 256, 256
      %202 = vsyncadd [#allocation4], %s201
      %s204 = sshll.u32 [#allocation8], 4
      %s205 = int_to_ptr.vmem [resolvable:$true] %s204
      %207 = dma.vmem_to_hbm [thread:$0]  %s205, 256, %s3, [#allocation4]
    $region29: #{tpu_custom_call.1} parent=1 // pred_fallthru
      _
    // Predicated region
    $region30: #{tpu_custom_call.1} parent=1 // pred_check
      _
    $region31: #{tpu_custom_call.1} parent=1 // pred_check_branch
      %209 = sbr.rel (0) target = $region33
    $region32: #{tpu_custom_call.1} parent=1 // pred_region
      %210 = dma.done [#allocation4], 256
    $region33: #{tpu_custom_call.1} parent=1 // pred_fallthru
      _
    %211 = vsyncpa [#allocation3], 1
    %212 = vsyncpa [#allocation6], 1
    %213 = vsyncpa [#allocation4], 1

</llo_original>
